<compile_context>
chip_gen: v5e
topology: v5e:2x2
jax: 0.10.0
libtpu: 0.0.40
codegen_flags: <defaults>
</compile_context>

<pallas_src>
import functools

import jax
import jax.numpy as jnp
from jax.experimental import pallas as pl
from jax.experimental.pallas import tpu as pltpu


def _round_up(v: int, m: int) -> int:
    return ((v + m - 1) // m) * m


def _vmem_capacity_bytes() -> int:
    try:
        return int(pltpu.get_tpu_info().vmem_capacity_bytes)
    except Exception:
        # Conservative fallback (v7x-sized); safe on every generation.
        return 64 * 1024 * 1024


def _apply_activation(y, activation):
    if activation is None or activation == "identity":
        return y
    if activation == "relu":
        return jnp.maximum(y, 0.0)
    if callable(activation):
        # NOTE: must be strictly elementwise -- it is applied per (tm, tn)
        # output tile, so reductions (softmax, layernorm, ...) would be wrong.
        return activation(y)
    raise ValueError(f"unsupported activation: {activation!r}")


def _dense_kernel_acc_out(x_ref, w_ref, b_ref, o_ref, *, activation):
    """f32-output variant: accumulate directly into the resident output tile.

    x_ref: (tm, tk)  w_ref: (tk, tn)  b_ref: (1, tn) f32  o_ref: (tm, tn) f32.
    o_ref's block index ignores k, so it stays resident across the K loop.
    """
    k = pl.program_id(2)

    @pl.when(k == 0)
    def _init():
        o_ref[...] = jnp.zeros_like(o_ref)

    o_ref[...] += jnp.dot(x_ref[...], w_ref[...],
                          preferred_element_type=jnp.float32)

    @pl.when(k == pl.num_programs(2) - 1)
    def _finalize():
        y = o_ref[...] + b_ref[...]
        o_ref[...] = _apply_activation(y, activation)


def _dense_kernel_scratch(x_ref, w_ref, b_ref, o_ref, acc_ref, *, activation):
    """Narrow-output variant: f32 scratch accumulator, cast on finalize."""
    k = pl.program_id(2)

    @pl.when(k == 0)
    def _init():
        acc_ref[...] = jnp.zeros_like(acc_ref)

    acc_ref[...] += jnp.dot(x_ref[...], w_ref[...],
                            preferred_element_type=jnp.float32)

    @pl.when(k == pl.num_programs(2) - 1)
    def _finalize():
        y = acc_ref[...] + b_ref[...]
        o_ref[...] = _apply_activation(y, activation).astype(o_ref.dtype)


def _select_tiles(M, K, N, in_bytes, out_bytes, budget):
    """Pick (tm, tn, tk) that fit `budget` bytes of VMEM (double-buffered)."""
    sub = {1: 32, 2: 16}.get(in_bytes, 8)            # sublane multiple per dtype
    Mr, Kr, Nr = _round_up(M, sub), _round_up(K, 128), _round_up(N, 128)

    def cost(tm, tn, tk):
        acc = 0 if out_bytes == 4 else tm * tn * 4
        return (2 * (tm * tk + tk * tn) * in_bytes      # double-buffered x, W
                + 2 * tm * tn * out_bytes               # double-buffered out
                + 2 * tn * 4                            # bias (f32)
                + acc)

    if (Mr <= 256 and Kr * Nr * in_bytes <= budget // 2
            and cost(Mr, Nr, Kr) <= budget):
        # Small-M inference: keep the whole weight in one (j, k) block so W is
        # streamed from HBM exactly once (small-batch dense is W-BW bound).
        tm, tn, tk = Mr, Nr, Kr
    else:
        tm = min(512, Mr)
        tn = min(512, Nr)
        tk = min(1024, Kr)
        while cost(tm, tn, tk) > budget:
            if tk > 512:
                tk = _round_up(tk // 2, 128)
            elif tn > 256:
                tn = _round_up(tn // 2, 128)
            elif tk > 128:
                tk = _round_up(tk // 2, 128)
            elif tn > 128:
                tn = 128
            elif tm > sub:
                tm = max(sub, _round_up(tm // 2, sub))
            else:
                break

    # v7x has 2 TensorCores: make sure the "parallel" (i, j) grid has >= 2
    # blocks so megacore sharding has something to split. Splitting keeps the
    # same total W bytes, so it is essentially free on 1-TC chips too.
    if pl.cdiv(Mr, tm) * pl.cdiv(Nr, tn) < 2:
        if tn >= 256:
            tn = _round_up(tn // 2, 128)
        elif tm >= 2 * sub:
            tm = _round_up(tm // 2, sub)
    return tm, tn, tk


def dense_layer(x, weight, bias=None, activation="identity",
                compute_dtype=jnp.bfloat16):
    """y = activation(x @ weight + bias) via a tiled Pallas TPU matmul.

    x:      (M, K)
    weight: (K, N)   (nn.Linear weight transposed)
    bias:   (N,) or None
    compute_dtype: MXU input dtype (bf16 default -> peak MXU rate, half the
                   x/W DMA bytes). Accumulation is always f32.
    """
    M, K = x.shape
    Kw, N = weight.shape
    assert K == Kw, (K, Kw)
    out_dtype = x.dtype

    in_bytes = jnp.dtype(compute_dtype).itemsize
    out_bytes = jnp.dtype(out_dtype).itemsize
    budget = (_vmem_capacity_bytes() * 3) // 4   # headroom for Mosaic scratch

    tm, tn, tk = _select_tiles(M, K, N, in_bytes, out_bytes, budget)
    Mp, Kp, Np = _round_up(M, tm), _round_up(K, tk), _round_up(N, tn)

    # Cast to the MXU input dtype; pad only when the tiling requires it.
    # TODO(synk): for deployment, pre-cast/pre-pad `weight` (and bias) once at
    # parameter-load time so these become no-ops in the hot path.
    x_c = x.astype(compute_dtype)
    w_c = weight.astype(compute_dtype)
    if (Mp, Kp) != (M, K):
        x_c = jnp.pad(x_c, ((0, Mp - M), (0, Kp - K)))
    if (Kp, Np) != (K, N):
        w_c = jnp.pad(w_c, ((0, Kp - K), (0, Np - N)))
    if bias is None:
        b_c = jnp.zeros((1, Np), jnp.float32)
    else:
        b_c = bias.astype(jnp.float32).reshape(1, N)
        if Np != N:
            b_c = jnp.pad(b_c, ((0, 0), (0, Np - N)))

    grid = (Mp // tm, Np // tn, Kp // tk)

    use_scratch = out_bytes != 4
    kernel = functools.partial(
        _dense_kernel_scratch if use_scratch else _dense_kernel_acc_out,
        activation=activation)
    scratch = [pltpu.VMEM((tm, tn), jnp.float32)] if use_scratch else []

    tile_bytes = (2 * (tm * tk + tk * tn) * in_bytes
                  + 2 * tm * tn * out_bytes + 2 * tn * 4
                  + (tm * tn * 4 if use_scratch else 0))
    vmem_limit = int(min(budget, max(tile_bytes * 3 // 2, 16 * 1024 * 1024)))

    # Real traffic under this grid: x is read Np/tn times, W is read Mp/tm
    # times, the output is written once. Purely advisory for XLA scheduling.
    cost = pl.CostEstimate(
        flops=2 * Mp * Kp * Np,
        transcendentals=0,
        bytes_accessed=(in_bytes * (Mp * Kp * (Np // tn) + Kp * Np * (Mp // tm))
                        + 4 * Np + out_bytes * Mp * Np),
    )

    out_p = pl.pallas_call(
        kernel,
        out_shape=jax.ShapeDtypeStruct((Mp, Np), out_dtype),
        grid_spec=pltpu.PrefetchScalarGridSpec(
            num_scalar_prefetch=0,
            grid=grid,
            in_specs=[
                pl.BlockSpec((tm, tk), lambda i, j, k: (i, k)),   # x
                pl.BlockSpec((tk, tn), lambda i, j, k: (k, j)),   # W
                pl.BlockSpec((1, tn), lambda i, j, k: (0, j)),    # bias (j only)
            ],
            out_specs=pl.BlockSpec((tm, tn), lambda i, j, k: (i, j)),
            scratch_shapes=scratch,
        ),
        compiler_params=pltpu.CompilerParams(
            dimension_semantics=("parallel", "parallel", "arbitrary"),
            vmem_limit_bytes=vmem_limit,
        ),
        cost_estimate=cost,
    )(x_c, w_c, b_c)

    if (Mp, Np) != (M, N):
        out_p = out_p[:M, :N]
    return out_p


def reference_dense(x, weight, bias, activation="identity",
                    compute_dtype=jnp.bfloat16):
    """Reference matching the kernel's numerics (inputs cast to compute_dtype,
    f32 accumulation)."""
    xq = x.astype(compute_dtype).astype(jnp.float32)
    wq = weight.astype(compute_dtype).astype(jnp.float32)
    y = xq @ wq
    if bias is not None:
        y = y + bias.astype(jnp.float32)
    if activation == "relu":
        y = jnp.maximum(y, 0.0)
    return y


if __name__ == "__main__":
    key = jax.random.PRNGKey(0)
    k_x, k_w, k_b, k_x2, k_w2, k_b2 = jax.random.split(key, 6)

    # --- Test 1: module-sized shapes (batch=8, in_features=32 -> 64) --------
    batch, in_features, out_features = 8, 32, 64
    bound = 1.0 / (in_features ** 0.5)
    x = jax.random.normal(k_x, (batch, in_features), dtype=jnp.float32)
    # torch stores weight as (out, in); build that way, then transpose (glue).
    w_torch = jax.random.uniform(k_w, (out_features, in_features),
                                 minval=-bound, maxval=bound, dtype=jnp.float32)
    b = jax.random.uniform(k_b, (out_features,), minval=-bound, maxval=bound,
                           dtype=jnp.float32)
    w = w_torch.T

    y_id = jax.block_until_ready(dense_layer(x, w, b, activation="identity"))
    y_relu = jax.block_until_ready(dense_layer(x, w, b, activation="relu"))
    assert y_id.shape == (batch, out_features)
    assert jnp.allclose(y_id, reference_dense(x, w, b, "identity"),
                        atol=2e-3, rtol=2e-3)
    assert jnp.allclose(y_relu, reference_dense(x, w, b, "relu"),
                        atol=2e-3, rtol=2e-3)

    # --- Test 2: non-aligned shapes exercising the padded, tiled path -------
    M2, Kd2, N2 = 40, 200, 130
    bound2 = 1.0 / (Kd2 ** 0.5)
    x2 = jax.random.normal(k_x2, (M2, Kd2), dtype=jnp.float32)
    w2 = jax.random.uniform(k_w2, (Kd2, N2), minval=-bound2, maxval=bound2,
                            dtype=jnp.float32)
    b2 = jax.random.uniform(k_b2, (N2,), minval=-bound2, maxval=bound2,
                            dtype=jnp.float32)
    y2 = jax.block_until_ready(dense_layer(x2, w2, b2, activation="relu"))
    assert y2.shape == (M2, N2)
    assert jnp.allclose(y2, reference_dense(x2, w2, b2, "relu"),
                        atol=2e-3, rtol=2e-3)

    # --- Test 3: bf16 in/out -> exercises the scratch-accumulator variant ---
    y3 = jax.block_until_ready(
        dense_layer(x.astype(jnp.bfloat16), w.astype(jnp.bfloat16),
                    b.astype(jnp.bfloat16), activation="relu"))
    assert y3.dtype == jnp.bfloat16
    assert jnp.allclose(y3.astype(jnp.float32),
                        reference_dense(x, w, b, "relu"),
                        atol=2e-2, rtol=2e-2)

    # --- Test 4: exact f32 compute path (no bf16 cast) -----------------------
    y4 = jax.block_until_ready(
        dense_layer(x, w, b, activation="identity",
                    compute_dtype=jnp.float32))
    assert jnp.allclose(y4, x @ w + b, atol=1e-5, rtol=1e-5)

    print("KERNEL_OK")
</pallas_src>

<mosaic_0001>
module attributes {stable_mosaic.version = 11 : i64} {
  func.func @_dense_kernel_acc_out(%arg0: i32, %arg1: i32, %arg2: i32, %arg3: memref<16x128xbf16, #tpu.memory_space<vmem>>, %arg4: memref<128x128xbf16, #tpu.memory_space<vmem>>, %arg5: memref<1x128xf32, #tpu.memory_space<vmem>>, %arg6: memref<16x128xf32, #tpu.memory_space<vmem>>) attributes {dimension_semantics = [#tpu.dimension_semantics<parallel>, #tpu.dimension_semantics<parallel>, #tpu.dimension_semantics<arbitrary>], iteration_bounds = array<i64: 1, 1, 1>, scalar_prefetch = 0 : i64, scratch_operands = 0 : i64, tpu.core_type = #tpu.core_type<tc>, window_params = [{transform_indices = @transform_0, window_bounds = array<i64: 16, 128>}, {transform_indices = @transform_1, window_bounds = array<i64: 128, 128>}, {transform_indices = @transform_2, window_bounds = array<i64: 1, 128>}, {transform_indices = @transform_3, window_bounds = array<i64: 16, 128>}]} {
    %c0_i32 = arith.constant 0 : i32
    %0 = arith.cmpi eq, %arg2, %c0_i32 : i32
    %1 = arith.extui %0 : i1 to i32
    %c0_i32_0 = arith.constant 0 : i32
    %2 = arith.cmpi ne, %1, %c0_i32_0 : i32
    scf.if %2 {
      %cst_10 = arith.constant 0.000000e+00 : f32
      %12 = vector.broadcast %cst_10 : f32 to vector<16x128xf32>
      %c0_11 = arith.constant 0 : index
      %c0_12 = arith.constant 0 : index
      %13 = vector.load %arg6[%c0_11, %c0_12] : memref<16x128xf32, #tpu.memory_space<vmem>>, vector<16x128xf32>
      tpu.vector_store %arg6[%c0_11, %c0_12], %12 {strides = array<i32>} : memref<16x128xf32, #tpu.memory_space<vmem>>, vector<16x128xf32>,
    } else {
    }
    %c0 = arith.constant 0 : index
    %c0_1 = arith.constant 0 : index
    %3 = vector.load %arg6[%c0, %c0_1] : memref<16x128xf32, #tpu.memory_space<vmem>>, vector<16x128xf32>
    %c0_2 = arith.constant 0 : index
    %c0_3 = arith.constant 0 : index
    %4 = vector.load %arg3[%c0_2, %c0_3] : memref<16x128xbf16, #tpu.memory_space<vmem>>, vector<16x128xbf16>
    %c0_4 = arith.constant 0 : index
    %c0_5 = arith.constant 0 : index
    %5 = vector.load %arg4[%c0_4, %c0_5] : memref<128x128xbf16, #tpu.memory_space<vmem>>, vector<128x128xbf16>
    %cst = arith.constant dense<0.000000e+00> : vector<16x128xf32>
    %6 = tpu.matmul %4, %5, %cst {dimension_numbers = #tpu.dot_dimension_numbers<[1], [0], [0], [1], [0, 0, 1, 1], [], []>} : vector<16x128xbf16>, vector<128x128xbf16>, vector<16x128xf32> -> vector<16x128xf32>
    %7 = arith.addf %3, %6 : vector<16x128xf32>
    %c0_6 = arith.constant 0 : index
    %c0_7 = arith.constant 0 : index
    %8 = vector.load %arg6[%c0_6, %c0_7] : memref<16x128xf32, #tpu.memory_space<vmem>>, vector<16x128xf32>
    tpu.vector_store %arg6[%c0_6, %c0_7], %7 {strides = array<i32>} : memref<16x128xf32, #tpu.memory_space<vmem>>, vector<16x128xf32>,
    %c0_i32_8 = arith.constant 0 : i32
    %9 = arith.cmpi eq, %arg2, %c0_i32_8 : i32
    %10 = arith.extui %9 : i1 to i32
    %c0_i32_9 = arith.constant 0 : i32
    %11 = arith.cmpi ne, %10, %c0_i32_9 : i32
    scf.if %11 {
      %c0_10 = arith.constant 0 : index
      %c0_11 = arith.constant 0 : index
      %12 = vector.load %arg6[%c0_10, %c0_11] : memref<16x128xf32, #tpu.memory_space<vmem>>, vector<16x128xf32>
      %c0_12 = arith.constant 0 : index
      %c0_13 = arith.constant 0 : index
      %13 = vector.load %arg5[%c0_12, %c0_13] : memref<1x128xf32, #tpu.memory_space<vmem>>, vector<1x128xf32>
      %14 = vector.broadcast %13 : vector<1x128xf32> to vector<16x128xf32>
      %15 = arith.addf %12, %14 : vector<16x128xf32>
      %c0_14 = arith.constant 0 : index
      %c0_15 = arith.constant 0 : index
      %16 = vector.load %arg6[%c0_14, %c0_15] : memref<16x128xf32, #tpu.memory_space<vmem>>, vector<16x128xf32>
      tpu.vector_store %arg6[%c0_14, %c0_15], %15 {strides = array<i32>} : memref<16x128xf32, #tpu.memory_space<vmem>>, vector<16x128xf32>,
    } else {
    }
    return
  }
  func.func @transform_0(%arg0: i32, %arg1: i32, %arg2: i32) -> (i32, i32) {
    %c0_i32 = arith.constant 0 : i32
    return %arg0, %arg2 : i32, i32
  }
  func.func @transform_1(%arg0: i32, %arg1: i32, %arg2: i32) -> (i32, i32) {
    %c0_i32 = arith.constant 0 : i32
    return %arg2, %arg1 : i32, i32
  }
  func.func @transform_2(%arg0: i32, %arg1: i32, %arg2: i32) -> (i32, i32) {
    %c0_i32 = arith.constant 0 : i32
    %c0_i32_0 = arith.constant 0 : i32
    return %c0_i32, %arg1 : i32, i32
  }
  func.func @transform_3(%arg0: i32, %arg1: i32, %arg2: i32) -> (i32, i32) {
    %c0_i32 = arith.constant 0 : i32
    return %arg0, %arg1 : i32, i32
  }
}

</mosaic_0001>

<llo_original>
// kernel: tpu_custom_call.1
$region0: #{tpu_custom_call.1}
  #allocation0 [shape = 'u32[]', space=smem, size = 0x4, offset = 0x4, fixed_abs, tag = 'smem constant byte address 0x4 - core index']
  #allocation1 [shape = 'u32[72,128]{1,0:T(1,128)}', space=vmem, size = 0x9000, scoped, tag = 'internal scratch']
  %s0 = inlined_call_operand.hbm [shape: bf16[16,128], index: 0, kind: input, shape index: {}]
  %s1 = inlined_call_operand.hbm [shape: bf16[128,128], index: 1, kind: input, shape index: {}]
  %s2 = inlined_call_operand.vmem [shape: f32[1,128], index: 2, kind: input, shape index: {}]
  %s3 = inlined_call_operand.hbm [shape: f32[16,128], index: 3, kind: output, shape index: {}]
  %s4 = sld [smem:[#allocation0]]
  $region38: #{tpu_custom_call.1} parent=0
    _
  %s6 = ssub.s32 1, %s4
  %s7 = scalar_select 0, %s6, %s4
  $region1: #{tpu_custom_call.1} parent=0
    #allocation2 [shape = 'u8[4096]{0}', space=vmem, size = 0x1000, scoped, tag = 'input window, operand 0, single buffered']
    #allocation3 [shape = 's32[1]{0}', space=sflag, size = 0x4, scoped, tag = 'scoped memory for tpu_custom_call.1']
    #allocation4 [shape = 's32[1]{0}', space=sflag, size = 0x4, scoped, tag = 'scoped memory for tpu_custom_call.1']
    #allocation5 [shape = 'u8[32768]{0}', space=vmem, size = 0x8000, scoped, tag = 'input window, operand 1, single buffered']
    #allocation6 [shape = 's32[1]{0}', space=sflag, size = 0x4, scoped, tag = 'scoped memory for tpu_custom_call.1']
    #allocation7 [shape = 'u8[8192]{0}', space=vmem, size = 0x2000, scoped, tag = 'output window, operand 0, single buffered']
    %8 = vsyncpa [#allocation3], 0
    %9 = vsyncpa [#allocation6], 0
    %10 = vsyncpa [#allocation4], 0
    // Predicated region
    $region2: #{tpu_custom_call.1} parent=1 // pred_check
      _
    $region3: #{tpu_custom_call.1} parent=1 // pred_check_branch
      %12 = sbr.rel (0) target = $region5
    $region4: #{tpu_custom_call.1} parent=1 // pred_region
      %14 = vsyncadd [#allocation3], 0
      %s15 = sshll.u32 %s0, 4
      %s16 = int_to_ptr.hbm [resolvable:$true] %s15
      %s17 = sshll.u32 [#allocation2], 4
      %s18 = int_to_ptr.vmem [resolvable:$true] %s17
      %23 = dma.hbm_to_vmem [thread:$0]  %s16, 128, %s18, [#allocation3], 64, 64, 4
    $region5: #{tpu_custom_call.1} parent=1 // pred_fallthru
      _
    // Predicated region
    $region6: #{tpu_custom_call.1} parent=1 // pred_check
      _
    $region7: #{tpu_custom_call.1} parent=1 // pred_check_branch
      %25 = sbr.rel (0) target = $region9
    $region8: #{tpu_custom_call.1} parent=1 // pred_region
      %27 = vsyncadd [#allocation6], 0
      %s28 = sshll.u32 %s1, 4
      %s29 = int_to_ptr.hbm [resolvable:$true] %s28
      %s30 = sshll.u32 [#allocation5], 4
      %s31 = int_to_ptr.vmem [resolvable:$true] %s30
      %36 = dma.hbm_to_vmem [thread:$0]  %s29, 1024, %s31, [#allocation6], 64, 64, 4
    $region9: #{tpu_custom_call.1} parent=1 // pred_fallthru
      _
    // Predicated region
    $region10: #{tpu_custom_call.1} parent=1 // pred_check
      _
    $region11: #{tpu_custom_call.1} parent=1 // pred_check_branch
      %38 = sbr.rel (0) target = $region13
    $region12: #{tpu_custom_call.1} parent=1 // pred_region
      _
    $region13: #{tpu_custom_call.1} parent=1 // pred_fallthru
      _
    // Predicated region
    $region14: #{tpu_custom_call.1} parent=1 // pred_check
      _
    $region15: #{tpu_custom_call.1} parent=1 // pred_check_branch
      %40 = sbr.rel (0) target = $region17
    $region16: #{tpu_custom_call.1} parent=1 // pred_region
      %42 = dma.done [#allocation3], 128
    $region17: #{tpu_custom_call.1} parent=1 // pred_fallthru
      _
    // Predicated region
    $region18: #{tpu_custom_call.1} parent=1 // pred_check
      _
    $region19: #{tpu_custom_call.1} parent=1 // pred_check_branch
      %44 = sbr.rel (0) target = $region21
    $region20: #{tpu_custom_call.1} parent=1 // pred_region
      %46 = dma.done [#allocation6], 1024
    $region21: #{tpu_custom_call.1} parent=1 // pred_fallthru
      _
    %p47 = scmp.eq.s32.totalorder 0, 0
    // Predicated region
    $region22: #{tpu_custom_call.1} parent=1 // pred_check
      %p48 = pneg %p47
    $region23: #{tpu_custom_call.1} parent=1 // pred_check_branch
      %50 = sbr.rel (%p48) target = $region25
    $region24: #{tpu_custom_call.1} parent=1 // pred_region
      %51 = vst [vmem:[#allocation7] sm:$0xff] 0.0
      %52 = vst [vmem:[#allocation7 + $0x8] sm:$0xff] 0.0
    $region25: #{tpu_custom_call.1} parent=1 // pred_fallthru
      _
    %v53 = vld [vmem:[#allocation7] sm:$0xff]
    %v54 = vld [vmem:[#allocation7 + $0x8] sm:$0xff]
    %v55 = vld [vmem:[#allocation2] sm:$0xf]
    %v56 = vld [vmem:[#allocation2 + $0x4] sm:$0xf]
    %v57 = vld [vmem:[#allocation5] sm:$0xf]
    %v58 = vld [vmem:[#allocation5 + $0x4] sm:$0xf]
    %v59 = vld [vmem:[#allocation5 + $0x8] sm:$0xf]
    %v60 = vld [vmem:[#allocation5 + $0xc] sm:$0xf]
    %v61 = vld [vmem:[#allocation5 + $0x10] sm:$0xf]
    %v62 = vld [vmem:[#allocation5 + $0x14] sm:$0xf]
    %v63 = vld [vmem:[#allocation5 + $0x18] sm:$0xf]
    %v64 = vld [vmem:[#allocation5 + $0x1c] sm:$0xf]
    %v65 = vld [vmem:[#allocation5 + $0x20] sm:$0xf]
    %v66 = vld [vmem:[#allocation5 + $0x24] sm:$0xf]
    %v67 = vld [vmem:[#allocation5 + $0x28] sm:$0xf]
    %v68 = vld [vmem:[#allocation5 + $0x2c] sm:$0xf]
    %v69 = vld [vmem:[#allocation5 + $0x30] sm:$0xf]
    %v70 = vld [vmem:[#allocation5 + $0x34] sm:$0xf]
    %v71 = vld [vmem:[#allocation5 + $0x38] sm:$0xf]
    %v72 = vld [vmem:[#allocation5 + $0x3c] sm:$0xf]
    %v75 = vunpack.c.l.b16 %v55
    %v76 = vunpack.c.l.b16 %v56
    %v77 = vpack.c.b16 %v76, %v75
    %v95 = vunpack.c.l.b16 %v57
    %v96 = vunpack.c.l.b16 %v58
    %v97 = vunpack.c.l.b16 %v59
    %v98 = vunpack.c.l.b16 %v60
    %v99 = vunpack.c.l.b16 %v61
    %v100 = vunpack.c.l.b16 %v62
    %v101 = vunpack.c.l.b16 %v63
    %v102 = vunpack.c.l.b16 %v64
    %v103 = vunpack.c.l.b16 %v65
    %v104 = vunpack.c.l.b16 %v66
    %v105 = vunpack.c.l.b16 %v67
    %v106 = vunpack.c.l.b16 %v68
    %v107 = vunpack.c.l.b16 %v69
    %v108 = vunpack.c.l.b16 %v70
    %v109 = vunpack.c.l.b16 %v71
    %v110 = vunpack.c.l.b16 %v72
    %v111 = vpack.c.b16 %v96, %v95
    %v112 = vpack.c.b16 %v98, %v97
    %v113 = vpack.c.b16 %v100, %v99
    %v114 = vpack.c.b16 %v102, %v101
    %v115 = vpack.c.b16 %v104, %v103
    %v116 = vpack.c.b16 %v106, %v105
    %v117 = vpack.c.b16 %v108, %v107
    %v118 = vpack.c.b16 %v110, %v109
    %127 = vmatpush.bf16.msra.mxu0 %v118
    %128 = vmatpush.bf16.msra.mxu0 %v117
    %129 = vmatpush.bf16.msra.mxu0 %v116
    %130 = vmatpush.bf16.msra.mxu0 %v115
    %131 = vmatpush.bf16.msra.mxu0 %v114
    %132 = vmatpush.bf16.msra.mxu0 %v113
    %133 = vmatpush.bf16.msra.mxu0 %v112
    %134 = vmatpush.bf16.msra.mxu0 %v111
    %135 = vmatmul.bf16.gmra.mxu0 %v77
    %v136 = vpop.f32.mrf.mxu0
    %v137 = vadd.f32 0.0, %v136
    %v138 = vpop.f32.mrf.mxu0
    %v139 = vadd.f32 0.0, %v138
    %140 = vdwg.mxu0
    %v141 = vadd.f32 %v53, %v137
    %v142 = vadd.f32 %v54, %v139
    %143 = vst [vmem:[#allocation7] sm:$0xff] %v141
    %144 = vst [vmem:[#allocation7 + $0x8] sm:$0xff] %v142
    // Predicated region
    $region26: #{tpu_custom_call.1} parent=1 // pred_check
      %p145 = pneg %p47
    $region27: #{tpu_custom_call.1} parent=1 // pred_check_branch
      %147 = sbr.rel (%p145) target = $region29
    $region28: #{tpu_custom_call.1} parent=1 // pred_region
      %v148 = vld [vmem:[#allocation7] sm:$0xff]
      %v149 = vld [vmem:[#allocation7 + $0x8] sm:$0xff]
      %v150 = vld [vmem:[%s2] sm:$0x1]
      %v152 = vperm.slane %v150, 0
      %v154 = vadd.f32 %v148, %v152
      %v155 = vadd.f32 %v149, %v152
      %156 = vst [vmem:[#allocation7] sm:$0xff] %v154
      %157 = vst [vmem:[#allocation7 + $0x8] sm:$0xff] %v155
    $region29: #{tpu_custom_call.1} parent=1 // pred_fallthru
      _
    // Predicated region
    $region30: #{tpu_custom_call.1} parent=1 // pred_check
      _
    $region31: #{tpu_custom_call.1} parent=1 // pred_check_branch
      %159 = sbr.rel (0) target = $region33
    $region32: #{tpu_custom_call.1} parent=1 // pred_region
      %161 = vsyncadd [#allocation4], 0
      %s162 = sshll.u32 [#allocation7], 4
      %s163 = int_to_ptr.vmem [resolvable:$true] %s162
      %s164 = sshll.u32 %s3, 4
      %s165 = int_to_ptr.hbm [resolvable:$true] %s164
      %170 = dma.vmem_to_hbm [thread:$0]  %s163, 256, %s165, [#allocation4], 128, 128, 8
    $region33: #{tpu_custom_call.1} parent=1 // pred_fallthru
      _
    // Predicated region
    $region34: #{tpu_custom_call.1} parent=1 // pred_check
      _
    $region35: #{tpu_custom_call.1} parent=1 // pred_check_branch
      %172 = sbr.rel (0) target = $region37
    $region36: #{tpu_custom_call.1} parent=1 // pred_region
      %174 = dma.done [#allocation4], 256
    $region37: #{tpu_custom_call.1} parent=1 // pred_fallthru
      _
    %175 = vsyncpa [#allocation3], 1
    %176 = vsyncpa [#allocation6], 1
    %177 = vsyncpa [#allocation4], 1

</llo_original>
